<compile_context>
chip_gen: v6e
topology: v6e:2x2x1
jax: 0.10.0
libtpu: 0.0.40
codegen_flags: <defaults>
</compile_context>

<pallas_src>
import functools
import math

import numpy as np
import jax
import jax.numpy as jnp
from jax.experimental import pallas as pl
from jax.experimental.pallas import tpu as pltpu

# Constants implied by MRRWeightBank.__init__ / MicroringResonator defaults.
_KAPPA = 0.5                  # clamp(coupling_strength=0.5, 0.1, 0.9)
_Q_FACTOR = 15000.0
_KERR = 2.7e-18               # kerr_coefficient
_RING_RADIUS = 5e-6
_N_GROUP = 4.2
_WL_RANGE = (1.53e-6, 1.57e-6)

# Derived scalar constants (folded at trace time).
_T = math.sqrt(1.0 - _KAPPA * _KAPPA)
_ALPHA = 1.0 - math.pi / _Q_FACTOR
_AT = _ALPHA * _T
_ONE_PLUS_AT2 = 1.0 + _AT * _AT
_TWO_AT = 2.0 * _AT
_K2A = _KAPPA * _KAPPA * _ALPHA          # |kappa * sqrt(alpha)|^2


# ---------------------------------------------------------------------------
# Kernel
# ---------------------------------------------------------------------------
def _mrr_weight_bank_kernel(x_ref, drop_ref, out_ref):
    """grid = (wavelength tiles, batch tiles), both 'parallel'.

    x_ref   : [n_in,  tb, tw]   input tile  (batch in the sublane slot)
    drop_ref: [n_in, n_out, tw] drop-port transmission (precomputed in XLA)
    out_ref : [n_out, tb, tw]   output tile
    """
    n_in = x_ref.shape[0]
    n_out = out_ref.shape[0]
    for i in range(n_out):
        # One fused elementwise chain per output row: no large accumulator is
        # read-modify-written through VMEM across j, every x/out access is a
        # dense leading-axis [tb, tw] slab, and the drop operand is a tiny
        # [1, tw] row broadcast over sublanes.
        acc = x_ref[0] * drop_ref[0, i:i + 1, :]
        for j in range(1, n_in):
            acc = acc + x_ref[j] * drop_ref[j, i:i + 1, :]
        out_ref[i] = acc.astype(out_ref.dtype)


# ---------------------------------------------------------------------------
# Host-side helpers
# ---------------------------------------------------------------------------
@functools.lru_cache(maxsize=32)
def _detuning_device(n_outputs, n_inputs, n_wavelengths, wavelength_range):
    """Memoized f64 ring-geometry precompute: det[j, i, w] = 2*pi*(wl-cwl)/fsr."""
    wl_min, wl_max = wavelength_range
    wl = np.linspace(wl_min, wl_max, n_wavelengths, dtype=np.float64)
    ii = np.arange(n_outputs, dtype=np.float64)[None, :]     # output index i
    jj = np.arange(n_inputs, dtype=np.float64)[:, None]      # input index j
    # cwl_t[j, i] == cwl[i, j] of the PyTorch module.
    cwl = wl_min + (wl_max - wl_min) * (ii * n_inputs + jj) / (n_inputs * n_outputs)
    fsr = cwl * cwl / (_N_GROUP * 2.0 * np.pi * _RING_RADIUS)
    det = 2.0 * np.pi * (wl[None, None, :] - cwl[:, :, None]) / fsr[:, :, None]
    return jnp.asarray(det.astype(np.float32))               # [n_in, n_out, n_wl]


def _vmem_limit_bytes():
    """~70% of the per-core physical VMEM (v7x: ~44 MiB; v5e/v6e: ~90 MiB)."""
    try:
        cap = pltpu.get_tpu_info().vmem_capacity_bytes
    except Exception:
        cap = 64 * 1024 * 1024
    return int(min(max(int(cap * 0.70), 32 * 1024 * 1024), 100 * 1024 * 1024))


def _pick_tiles(batch, n_in, n_out, n_wl, vmem_budget, max_tb, max_tw):
    """Lane-dense wavelength tile + sublane (batch) tile sized to the VMEM budget."""
    max_tw = max(128, max_tw)
    tw = n_wl if n_wl <= max_tw else (max_tw // 128) * 128            # full dim or x128
    bytes_per_batch_row = 2 * (n_in + n_out) * tw * 4                 # double-buffered
    cap = max(8, (vmem_budget // 2) // max(bytes_per_batch_row, 1))   # half budget -> tiles
    cap = max(8, min(max_tb, (cap // 8) * 8))                         # multiple of 8
    tb = batch if batch <= cap else cap                               # full dim or x8
    return tb, tw


# ---------------------------------------------------------------------------
# Forward
# ---------------------------------------------------------------------------
@functools.partial(jax.jit, static_argnames=("include_kerr_update", "max_tb", "max_tw"))
def _mrr_forward(x, det, include_kerr_update=False, max_tb=512, max_tw=512):
    batch, n_in, n_wl = x.shape
    _, n_out, _ = det.shape

    phase = det
    if include_kerr_update:
        # In-call Kerr update: kerr*0.1*mean_{b,w}(x[:,j,:]^2) ~ 1e-19 rad, far
        # below f32 resolution against detunings of O(1-14) rad -> numerically
        # a no-op, kept behind a flag because it costs a full extra read of x.
        mean_power = jnp.mean(x * x, axis=(0, 2))                      # [n_in]
        phase = det + (jnp.float32(_KERR * 0.1) * mean_power)[:, None, None]

    # Drop-port transmission, once per call in plain XLA (tiny):
    # |kappa*sqrt(alpha)/(1 - alpha*t*e^{i p})|^2
    #   = kappa^2*alpha / (1 + (alpha*t)^2 - 2*alpha*t*cos(p))
    drop = jnp.float32(_K2A) / (
        jnp.float32(_ONE_PLUS_AT2) - jnp.float32(_TWO_AT) * jnp.cos(phase))

    # Batch into the sublane slot -> dense (8,128) x/out blocks in the kernel.
    x_t = jnp.transpose(x, (1, 0, 2))                                  # [n_in, B, n_wl]

    vmem_limit = _vmem_limit_bytes()
    tb, tw = _pick_tiles(batch, n_in, n_out, n_wl, vmem_limit, max_tb, max_tw)
    grid = (pl.cdiv(n_wl, tw), pl.cdiv(batch, tb))    # partial last blocks allowed

    out_t = pl.pallas_call(
        _mrr_weight_bank_kernel,
        out_shape=jax.ShapeDtypeStruct((n_out, batch, n_wl), jnp.float32),
        grid=grid,
        in_specs=[
            # x: block index follows (wavelength tile, batch tile).
            pl.BlockSpec((n_in, tb, tw), lambda wi, bi: (0, bi, wi)),
            # drop: constant over the inner batch axis -> fetched once per wl tile.
            # (If v5e traces still show exposed DMA on x, sweep
            #  pipeline_mode=pl.Buffered(3) on the x spec.)
            pl.BlockSpec((n_in, n_out, tw), lambda wi, bi: (0, 0, wi)),
        ],
        out_specs=pl.BlockSpec((n_out, tb, tw), lambda wi, bi: (0, bi, wi)),
        compiler_params=pltpu.CompilerParams(
            dimension_semantics=("parallel", "parallel"),
            vmem_limit_bytes=vmem_limit,
        ),
    )(x_t, drop)

    return jnp.transpose(out_t, (1, 0, 2))                              # [B, n_out, n_wl]


def mrr_weight_bank_forward(input_signals, n_outputs,
                            wavelength_range=_WL_RANGE,
                            include_kerr_update=False,
                            max_tb=512, max_tw=512):
    """input_signals: [batch, n_inputs, n_wavelengths] -> [batch, n_outputs, n_wavelengths]."""
    x = jnp.asarray(input_signals, jnp.float32)
    _, n_in, n_wl = x.shape
    det = _detuning_device(int(n_outputs), int(n_in), int(n_wl),
                           tuple(float(w) for w in wavelength_range))
    return _mrr_forward(x, det, include_kerr_update=include_kerr_update,
                        max_tb=int(max_tb), max_tw=int(max_tw))


# ---------------------------------------------------------------------------
# f64 reference (mirrors the PyTorch forward: drop-port sum)
# ---------------------------------------------------------------------------
def _reference(input_signals, n_outputs, wavelength_range=_WL_RANGE):
    x = np.asarray(input_signals, dtype=np.float64)
    batch, n_in, n_wl = x.shape
    wl_min, wl_max = wavelength_range
    wl = np.linspace(wl_min, wl_max, n_wl, dtype=np.float64)
    ii = np.arange(n_outputs, dtype=np.float64)[:, None]
    jj = np.arange(n_in, dtype=np.float64)[None, :]
    cwl = wl_min + (wl_max - wl_min) * (ii * n_in + jj) / (n_in * n_outputs)
    fsr = cwl * cwl / (_N_GROUP * 2.0 * np.pi * _RING_RADIUS)
    mean_power = np.mean(x * x, axis=(0, 2))                         # [n_in]
    phase_shift = _KERR * 0.1 * mean_power                           # in-call Kerr update
    total_phase = (2.0 * np.pi * (wl[None, None, :] - cwl[:, :, None]) / fsr[:, :, None]
                   + phase_shift[None, :, None])
    den = 1.0 - _ALPHA * _T * np.exp(1j * total_phase)
    drop = np.abs(_KAPPA * math.sqrt(_ALPHA) / den) ** 2             # [n_out, n_in, n_wl]
    return np.einsum("bjw,ijw->biw", x, drop)


if __name__ == "__main__":
    # Small shapes consistent with the module: batch=2, n_inputs=4, n_outputs=3,
    # n_wavelengths=8.
    B, N_IN, N_OUT, N_WL = 2, 4, 3, 8
    x = jax.random.normal(jax.random.PRNGKey(0), (B, N_IN, N_WL), dtype=jnp.float32)

    out = jax.block_until_ready(mrr_weight_bank_forward(x, N_OUT))
    assert out.shape == (B, N_OUT, N_WL) and out.dtype == jnp.float32
    ref = _reference(np.asarray(x), N_OUT)
    # f64 ground truth vs f32 kernel: near-resonance drop values (~14) amplify
    # f32 rounding, so ~1e-3-class tolerances are the honest f32 bound.
    np.testing.assert_allclose(np.asarray(out), ref, rtol=1e-3, atol=3e-3)

    # Second check: partial (cdiv) blocks on BOTH grid axes (batch=11 with
    # tb capped at 8, n_wl=300 with tw capped at 128).
    B2, N_WL2 = 11, 300
    x2 = jax.random.normal(jax.random.PRNGKey(1), (B2, N_IN, N_WL2), dtype=jnp.float32)
    out2 = jax.block_until_ready(
        mrr_weight_bank_forward(x2, N_OUT, max_tb=8, max_tw=128))
    assert out2.shape == (B2, N_OUT, N_WL2)
    ref2 = _reference(np.asarray(x2), N_OUT)
    np.testing.assert_allclose(np.asarray(out2), ref2, rtol=1e-3, atol=3e-3)

    print("KERNEL_OK")
</pallas_src>

<mosaic_0001>
module attributes {stable_mosaic.version = 11 : i64} {
  func.func @_mrr_weight_bank_kernel(%arg0: i32, %arg1: i32, %arg2: memref<4x2x8xf32, #tpu.memory_space<vmem>>, %arg3: memref<4x3x8xf32, #tpu.memory_space<vmem>>, %arg4: memref<3x2x8xf32, #tpu.memory_space<vmem>>) attributes {dimension_semantics = [#tpu.dimension_semantics<parallel>, #tpu.dimension_semantics<parallel>], iteration_bounds = array<i64: 1, 1>, scalar_prefetch = 0 : i64, scratch_operands = 0 : i64, tpu.core_type = #tpu.core_type<tc>, window_params = [{transform_indices = @transform_0, window_bounds = array<i64: 4, 2, 8>}, {transform_indices = @transform_1, window_bounds = array<i64: 4, 3, 8>}, {transform_indices = @transform_2, window_bounds = array<i64: 3, 2, 8>}]} {
    %c0 = arith.constant 0 : index
    %c0_0 = arith.constant 0 : index
    %c0_1 = arith.constant 0 : index
    %0 = vector.load %arg2[%c0, %c0_0, %c0_1] : memref<4x2x8xf32, #tpu.memory_space<vmem>>, vector<1x2x8xf32>
    %1 = vector.shape_cast %0 : vector<1x2x8xf32> to vector<2x8xf32>
    %c0_2 = arith.constant 0 : index
    %c0_3 = arith.constant 0 : index
    %c0_4 = arith.constant 0 : index
    %2 = vector.load %arg3[%c0_2, %c0_3, %c0_4] : memref<4x3x8xf32, #tpu.memory_space<vmem>>, vector<1x1x8xf32>
    %3 = vector.shape_cast %2 : vector<1x1x8xf32> to vector<1x8xf32>
    %4 = vector.broadcast %3 : vector<1x8xf32> to vector<2x8xf32>
    %5 = arith.mulf %1, %4 : vector<2x8xf32>
    %c1 = arith.constant 1 : index
    %c0_5 = arith.constant 0 : index
    %c0_6 = arith.constant 0 : index
    %6 = vector.load %arg2[%c1, %c0_5, %c0_6] : memref<4x2x8xf32, #tpu.memory_space<vmem>>, vector<1x2x8xf32>
    %7 = vector.shape_cast %6 : vector<1x2x8xf32> to vector<2x8xf32>
    %c1_7 = arith.constant 1 : index
    %c0_8 = arith.constant 0 : index
    %c0_9 = arith.constant 0 : index
    %8 = vector.load %arg3[%c1_7, %c0_8, %c0_9] : memref<4x3x8xf32, #tpu.memory_space<vmem>>, vector<1x1x8xf32>
    %9 = vector.shape_cast %8 : vector<1x1x8xf32> to vector<1x8xf32>
    %10 = vector.broadcast %9 : vector<1x8xf32> to vector<2x8xf32>
    %11 = arith.mulf %7, %10 : vector<2x8xf32>
    %12 = arith.addf %5, %11 : vector<2x8xf32>
    %c2 = arith.constant 2 : index
    %c0_10 = arith.constant 0 : index
    %c0_11 = arith.constant 0 : index
    %13 = vector.load %arg2[%c2, %c0_10, %c0_11] : memref<4x2x8xf32, #tpu.memory_space<vmem>>, vector<1x2x8xf32>
    %14 = vector.shape_cast %13 : vector<1x2x8xf32> to vector<2x8xf32>
    %c2_12 = arith.constant 2 : index
    %c0_13 = arith.constant 0 : index
    %c0_14 = arith.constant 0 : index
    %15 = vector.load %arg3[%c2_12, %c0_13, %c0_14] : memref<4x3x8xf32, #tpu.memory_space<vmem>>, vector<1x1x8xf32>
    %16 = vector.shape_cast %15 : vector<1x1x8xf32> to vector<1x8xf32>
    %17 = vector.broadcast %16 : vector<1x8xf32> to vector<2x8xf32>
    %18 = arith.mulf %14, %17 : vector<2x8xf32>
    %19 = arith.addf %12, %18 : vector<2x8xf32>
    %c3 = arith.constant 3 : index
    %c0_15 = arith.constant 0 : index
    %c0_16 = arith.constant 0 : index
    %20 = vector.load %arg2[%c3, %c0_15, %c0_16] : memref<4x2x8xf32, #tpu.memory_space<vmem>>, vector<1x2x8xf32>
    %21 = vector.shape_cast %20 : vector<1x2x8xf32> to vector<2x8xf32>
    %c3_17 = arith.constant 3 : index
    %c0_18 = arith.constant 0 : index
    %c0_19 = arith.constant 0 : index
    %22 = vector.load %arg3[%c3_17, %c0_18, %c0_19] : memref<4x3x8xf32, #tpu.memory_space<vmem>>, vector<1x1x8xf32>
    %23 = vector.shape_cast %22 : vector<1x1x8xf32> to vector<1x8xf32>
    %24 = vector.broadcast %23 : vector<1x8xf32> to vector<2x8xf32>
    %25 = arith.mulf %21, %24 : vector<2x8xf32>
    %26 = arith.addf %19, %25 : vector<2x8xf32>
    %c0_20 = arith.constant 0 : index
    %c0_21 = arith.constant 0 : index
    %c0_22 = arith.constant 0 : index
    %27 = vector.load %arg4[%c0_20, %c0_21, %c0_22] : memref<3x2x8xf32, #tpu.memory_space<vmem>>, vector<1x2x8xf32>
    %28 = vector.shape_cast %27 : vector<1x2x8xf32> to vector<2x8xf32>
    %29 = vector.shape_cast %26 : vector<2x8xf32> to vector<1x2x8xf32>
    tpu.vector_store %arg4[%c0_20, %c0_21, %c0_22], %29 {strides = array<i32>} : memref<3x2x8xf32, #tpu.memory_space<vmem>>, vector<1x2x8xf32>,
    %c0_23 = arith.constant 0 : index
    %c0_24 = arith.constant 0 : index
    %c0_25 = arith.constant 0 : index
    %30 = vector.load %arg2[%c0_23, %c0_24, %c0_25] : memref<4x2x8xf32, #tpu.memory_space<vmem>>, vector<1x2x8xf32>
    %31 = vector.shape_cast %30 : vector<1x2x8xf32> to vector<2x8xf32>
    %c0_26 = arith.constant 0 : index
    %c1_27 = arith.constant 1 : index
    %c0_28 = arith.constant 0 : index
    %32 = vector.load %arg3[%c0_26, %c1_27, %c0_28] : memref<4x3x8xf32, #tpu.memory_space<vmem>>, vector<1x1x8xf32>
    %33 = vector.shape_cast %32 : vector<1x1x8xf32> to vector<1x8xf32>
    %34 = vector.broadcast %33 : vector<1x8xf32> to vector<2x8xf32>
    %35 = arith.mulf %31, %34 : vector<2x8xf32>
    %c1_29 = arith.constant 1 : index
    %c0_30 = arith.constant 0 : index
    %c0_31 = arith.constant 0 : index
    %36 = vector.load %arg2[%c1_29, %c0_30, %c0_31] : memref<4x2x8xf32, #tpu.memory_space<vmem>>, vector<1x2x8xf32>
    %37 = vector.shape_cast %36 : vector<1x2x8xf32> to vector<2x8xf32>
    %c1_32 = arith.constant 1 : index
    %c1_33 = arith.constant 1 : index
    %c0_34 = arith.constant 0 : index
    %38 = vector.load %arg3[%c1_32, %c1_33, %c0_34] : memref<4x3x8xf32, #tpu.memory_space<vmem>>, vector<1x1x8xf32>
    %39 = vector.shape_cast %38 : vector<1x1x8xf32> to vector<1x8xf32>
    %40 = vector.broadcast %39 : vector<1x8xf32> to vector<2x8xf32>
    %41 = arith.mulf %37, %40 : vector<2x8xf32>
    %42 = arith.addf %35, %41 : vector<2x8xf32>
    %c2_35 = arith.constant 2 : index
    %c0_36 = arith.constant 0 : index
    %c0_37 = arith.constant 0 : index
    %43 = vector.load %arg2[%c2_35, %c0_36, %c0_37] : memref<4x2x8xf32, #tpu.memory_space<vmem>>, vector<1x2x8xf32>
    %44 = vector.shape_cast %43 : vector<1x2x8xf32> to vector<2x8xf32>
    %c2_38 = arith.constant 2 : index
    %c1_39 = arith.constant 1 : index
    %c0_40 = arith.constant 0 : index
    %45 = vector.load %arg3[%c2_38, %c1_39, %c0_40] : memref<4x3x8xf32, #tpu.memory_space<vmem>>, vector<1x1x8xf32>
    %46 = vector.shape_cast %45 : vector<1x1x8xf32> to vector<1x8xf32>
    %47 = vector.broadcast %46 : vector<1x8xf32> to vector<2x8xf32>
    %48 = arith.mulf %44, %47 : vector<2x8xf32>
    %49 = arith.addf %42, %48 : vector<2x8xf32>
    %c3_41 = arith.constant 3 : index
    %c0_42 = arith.constant 0 : index
    %c0_43 = arith.constant 0 : index
    %50 = vector.load %arg2[%c3_41, %c0_42, %c0_43] : memref<4x2x8xf32, #tpu.memory_space<vmem>>, vector<1x2x8xf32>
    %51 = vector.shape_cast %50 : vector<1x2x8xf32> to vector<2x8xf32>
    %c3_44 = arith.constant 3 : index
    %c1_45 = arith.constant 1 : index
    %c0_46 = arith.constant 0 : index
    %52 = vector.load %arg3[%c3_44, %c1_45, %c0_46] : memref<4x3x8xf32, #tpu.memory_space<vmem>>, vector<1x1x8xf32>
    %53 = vector.shape_cast %52 : vector<1x1x8xf32> to vector<1x8xf32>
    %54 = vector.broadcast %53 : vector<1x8xf32> to vector<2x8xf32>
    %55 = arith.mulf %51, %54 : vector<2x8xf32>
    %56 = arith.addf %49, %55 : vector<2x8xf32>
    %c1_47 = arith.constant 1 : index
    %c0_48 = arith.constant 0 : index
    %c0_49 = arith.constant 0 : index
    %57 = vector.load %arg4[%c1_47, %c0_48, %c0_49] : memref<3x2x8xf32, #tpu.memory_space<vmem>>, vector<1x2x8xf32>
    %58 = vector.shape_cast %57 : vector<1x2x8xf32> to vector<2x8xf32>
    %59 = vector.shape_cast %56 : vector<2x8xf32> to vector<1x2x8xf32>
    tpu.vector_store %arg4[%c1_47, %c0_48, %c0_49], %59 {strides = array<i32>} : memref<3x2x8xf32, #tpu.memory_space<vmem>>, vector<1x2x8xf32>,
    %c0_50 = arith.constant 0 : index
    %c0_51 = arith.constant 0 : index
    %c0_52 = arith.constant 0 : index
    %60 = vector.load %arg2[%c0_50, %c0_51, %c0_52] : memref<4x2x8xf32, #tpu.memory_space<vmem>>, vector<1x2x8xf32>
    %61 = vector.shape_cast %60 : vector<1x2x8xf32> to vector<2x8xf32>
    %c0_53 = arith.constant 0 : index
    %c2_54 = arith.constant 2 : index
    %c0_55 = arith.constant 0 : index
    %62 = vector.load %arg3[%c0_53, %c2_54, %c0_55] : memref<4x3x8xf32, #tpu.memory_space<vmem>>, vector<1x1x8xf32>
    %63 = vector.shape_cast %62 : vector<1x1x8xf32> to vector<1x8xf32>
    %64 = vector.broadcast %63 : vector<1x8xf32> to vector<2x8xf32>
    %65 = arith.mulf %61, %64 : vector<2x8xf32>
    %c1_56 = arith.constant 1 : index
    %c0_57 = arith.constant 0 : index
    %c0_58 = arith.constant 0 : index
    %66 = vector.load %arg2[%c1_56, %c0_57, %c0_58] : memref<4x2x8xf32, #tpu.memory_space<vmem>>, vector<1x2x8xf32>
    %67 = vector.shape_cast %66 : vector<1x2x8xf32> to vector<2x8xf32>
    %c1_59 = arith.constant 1 : index
    %c2_60 = arith.constant 2 : index
    %c0_61 = arith.constant 0 : index
    %68 = vector.load %arg3[%c1_59, %c2_60, %c0_61] : memref<4x3x8xf32, #tpu.memory_space<vmem>>, vector<1x1x8xf32>
    %69 = vector.shape_cast %68 : vector<1x1x8xf32> to vector<1x8xf32>
    %70 = vector.broadcast %69 : vector<1x8xf32> to vector<2x8xf32>
    %71 = arith.mulf %67, %70 : vector<2x8xf32>
    %72 = arith.addf %65, %71 : vector<2x8xf32>
    %c2_62 = arith.constant 2 : index
    %c0_63 = arith.constant 0 : index
    %c0_64 = arith.constant 0 : index
    %73 = vector.load %arg2[%c2_62, %c0_63, %c0_64] : memref<4x2x8xf32, #tpu.memory_space<vmem>>, vector<1x2x8xf32>
    %74 = vector.shape_cast %73 : vector<1x2x8xf32> to vector<2x8xf32>
    %c2_65 = arith.constant 2 : index
    %c2_66 = arith.constant 2 : index
    %c0_67 = arith.constant 0 : index
    %75 = vector.load %arg3[%c2_65, %c2_66, %c0_67] : memref<4x3x8xf32, #tpu.memory_space<vmem>>, vector<1x1x8xf32>
    %76 = vector.shape_cast %75 : vector<1x1x8xf32> to vector<1x8xf32>
    %77 = vector.broadcast %76 : vector<1x8xf32> to vector<2x8xf32>
    %78 = arith.mulf %74, %77 : vector<2x8xf32>
    %79 = arith.addf %72, %78 : vector<2x8xf32>
    %c3_68 = arith.constant 3 : index
    %c0_69 = arith.constant 0 : index
    %c0_70 = arith.constant 0 : index
    %80 = vector.load %arg2[%c3_68, %c0_69, %c0_70] : memref<4x2x8xf32, #tpu.memory_space<vmem>>, vector<1x2x8xf32>
    %81 = vector.shape_cast %80 : vector<1x2x8xf32> to vector<2x8xf32>
    %c3_71 = arith.constant 3 : index
    %c2_72 = arith.constant 2 : index
    %c0_73 = arith.constant 0 : index
    %82 = vector.load %arg3[%c3_71, %c2_72, %c0_73] : memref<4x3x8xf32, #tpu.memory_space<vmem>>, vector<1x1x8xf32>
    %83 = vector.shape_cast %82 : vector<1x1x8xf32> to vector<1x8xf32>
    %84 = vector.broadcast %83 : vector<1x8xf32> to vector<2x8xf32>
    %85 = arith.mulf %81, %84 : vector<2x8xf32>
    %86 = arith.addf %79, %85 : vector<2x8xf32>
    %c2_74 = arith.constant 2 : index
    %c0_75 = arith.constant 0 : index
    %c0_76 = arith.constant 0 : index
    %87 = vector.load %arg4[%c2_74, %c0_75, %c0_76] : memref<3x2x8xf32, #tpu.memory_space<vmem>>, vector<1x2x8xf32>
    %88 = vector.shape_cast %87 : vector<1x2x8xf32> to vector<2x8xf32>
    %89 = vector.shape_cast %86 : vector<2x8xf32> to vector<1x2x8xf32>
    tpu.vector_store %arg4[%c2_74, %c0_75, %c0_76], %89 {strides = array<i32>} : memref<3x2x8xf32, #tpu.memory_space<vmem>>, vector<1x2x8xf32>,
    return
  }
  func.func @transform_0(%arg0: i32, %arg1: i32) -> (i32, i32, i32) {
    %c0_i32 = arith.constant 0 : i32
    %c0_i32_0 = arith.constant 0 : i32
    return %c0_i32, %arg1, %arg0 : i32, i32, i32
  }
  func.func @transform_1(%arg0: i32, %arg1: i32) -> (i32, i32, i32) {
    %c0_i32 = arith.constant 0 : i32
    %c0_i32_0 = arith.constant 0 : i32
    %c0_i32_1 = arith.constant 0 : i32
    return %c0_i32, %c0_i32_0, %arg0 : i32, i32, i32
  }
  func.func @transform_2(%arg0: i32, %arg1: i32) -> (i32, i32, i32) {
    %c0_i32 = arith.constant 0 : i32
    %c0_i32_0 = arith.constant 0 : i32
    return %c0_i32, %arg1, %arg0 : i32, i32, i32
  }
}

</mosaic_0001>

<llo_original>
// kernel: _mrr_forward.1
$region0: #{_mrr_forward.1}
  #allocation0 [shape = 'u32[]', space=smem, size = 0x4, offset = 0x4, fixed_abs, tag = 'smem constant byte address 0x4 - core index']
  #allocation1 [shape = 'u32[144,128]{1,0:T(1,128)}', space=vmem, size = 0x12000, scoped, tag = 'internal scratch']
  %s0 = inlined_call_operand.vmem [shape: f32[4,2,8], index: 0, kind: input, shape index: {}]
  %s1 = inlined_call_operand.vmem [shape: f32[4,3,8], index: 1, kind: input, shape index: {}]
  %s2 = inlined_call_operand.hbm [shape: f32[3,2,8], index: 2, kind: output, shape index: {}]
  %s3 = sld [smem:[#allocation0]]
  $region18: #{_mrr_forward.1} parent=0
    _
  %s5 = ssub.s32 1, %s3
  %s6 = scalar_select 0, %s5, %s3
  $region1: #{_mrr_forward.1} parent=0
    #allocation2 [shape = 'u8[3072]{0}', space=vmem, size = 0xc00, scoped, tag = 'output window, operand 0, single buffered']
    #allocation3 [shape = 's32[1]{0}', space=sflag, size = 0x4, scoped, tag = 'scoped memory for _mrr_forward.1']
    %7 = vsyncpa [#allocation3], 0
    // Predicated region
    $region2: #{_mrr_forward.1} parent=1 // pred_check
      _
    $region3: #{_mrr_forward.1} parent=1 // pred_check_branch
      %9 = sbr.rel (0) target = $region5
    $region4: #{_mrr_forward.1} parent=1 // pred_region
      _
    $region5: #{_mrr_forward.1} parent=1 // pred_fallthru
      _
    // Predicated region
    $region6: #{_mrr_forward.1} parent=1 // pred_check
      _
    $region7: #{_mrr_forward.1} parent=1 // pred_check_branch
      %11 = sbr.rel (0) target = $region9
    $region8: #{_mrr_forward.1} parent=1 // pred_region
      _
    $region9: #{_mrr_forward.1} parent=1 // pred_fallthru
      _
    %v12 = vld [vmem:[%s0] sm:$0x3]
    %v13 = vld [vmem:[%s1] sm:$0x1]
    %v14 = vlaneseq
    %v15 = vshrl.u32 %v14, 7
    %v16 = vsub.s32 0, %v15
    %v17 = vrot.slane %v13, %v16
    %v18 = vmul.f32 %v12, %v17
    %s19 = scalar_lea.vmem %s0, 2
    %v20 = vld [vmem:[%s19] sm:$0x3]
    %s21 = scalar_lea.vmem %s1, 4
    %v22 = vld [vmem:[%s21] sm:$0x1]
    %v23 = vlaneseq
    %v24 = vshrl.u32 %v23, 7
    %v25 = vsub.s32 0, %v24
    %v26 = vrot.slane %v22, %v25
    %v27 = vmul.f32 %v20, %v26
    %v28 = vadd.f32 %v18, %v27
    %s29 = scalar_lea.vmem %s0, 4
    %v30 = vld [vmem:[%s29] sm:$0x3]
    %s31 = scalar_lea.vmem %s1, 8
    %v32 = vld [vmem:[%s31] sm:$0x1]
    %v33 = vlaneseq
    %v34 = vshrl.u32 %v33, 7
    %v35 = vsub.s32 0, %v34
    %v36 = vrot.slane %v32, %v35
    %v37 = vmul.f32 %v30, %v36
    %v38 = vadd.f32 %v28, %v37
    %s39 = scalar_lea.vmem %s0, 6
    %v40 = vld [vmem:[%s39] sm:$0x3]
    %s41 = scalar_lea.vmem %s1, 12
    %v42 = vld [vmem:[%s41] sm:$0x1]
    %v43 = vlaneseq
    %v44 = vshrl.u32 %v43, 7
    %v45 = vsub.s32 0, %v44
    %v46 = vrot.slane %v42, %v45
    %v47 = vmul.f32 %v40, %v46
    %v48 = vadd.f32 %v38, %v47
    %vm49 = vcmask 58368
    %50 = vst.msk [vmem:[#allocation2] sm:$0x3] %vm49, %v48
    %v51 = vld [vmem:[%s0] sm:$0x3]
    %v52 = vld [vmem:[%s1 + $0x1] sm:$0x1]
    %v53 = vlaneseq
    %v54 = vshrl.u32 %v53, 7
    %v55 = vsub.s32 0, %v54
    %v56 = vrot.slane %v52, %v55
    %v57 = vmul.f32 %v51, %v56
    %v58 = vld [vmem:[%s19] sm:$0x3]
    %v59 = vld [vmem:[%s21 + $0x1] sm:$0x1]
    %v60 = vlaneseq
    %v61 = vshrl.u32 %v60, 7
    %v62 = vsub.s32 0, %v61
    %v63 = vrot.slane %v59, %v62
    %v64 = vmul.f32 %v58, %v63
    %v65 = vadd.f32 %v57, %v64
    %v66 = vld [vmem:[%s29] sm:$0x3]
    %v67 = vld [vmem:[%s31 + $0x1] sm:$0x1]
    %v68 = vlaneseq
    %v69 = vshrl.u32 %v68, 7
    %v70 = vsub.s32 0, %v69
    %v71 = vrot.slane %v67, %v70
    %v72 = vmul.f32 %v66, %v71
    %v73 = vadd.f32 %v65, %v72
    %v74 = vld [vmem:[%s39] sm:$0x3]
    %v75 = vld [vmem:[%s41 + $0x1] sm:$0x1]
    %v76 = vlaneseq
    %v77 = vshrl.u32 %v76, 7
    %v78 = vsub.s32 0, %v77
    %v79 = vrot.slane %v75, %v78
    %v80 = vmul.f32 %v74, %v79
    %v81 = vadd.f32 %v73, %v80
    %s82 = scalar_lea.vmem [#allocation2], 2
    %83 = vst.msk [vmem:[%s82] sm:$0x3] %vm49, %v81
    %v84 = vld [vmem:[%s0] sm:$0x3]
    %v85 = vld [vmem:[%s1 + $0x2] sm:$0x1]
    %v86 = vlaneseq
    %v87 = vshrl.u32 %v86, 7
    %v88 = vsub.s32 0, %v87
    %v89 = vrot.slane %v85, %v88
    %v90 = vmul.f32 %v84, %v89
    %v91 = vld [vmem:[%s19] sm:$0x3]
    %v92 = vld [vmem:[%s21 + $0x2] sm:$0x1]
    %v93 = vlaneseq
    %v94 = vshrl.u32 %v93, 7
    %v95 = vsub.s32 0, %v94
    %v96 = vrot.slane %v92, %v95
    %v97 = vmul.f32 %v91, %v96
    %v98 = vadd.f32 %v90, %v97
    %v99 = vld [vmem:[%s29] sm:$0x3]
    %v100 = vld [vmem:[%s31 + $0x2] sm:$0x1]
    %v101 = vlaneseq
    %v102 = vshrl.u32 %v101, 7
    %v103 = vsub.s32 0, %v102
    %v104 = vrot.slane %v100, %v103
    %v105 = vmul.f32 %v99, %v104
    %v106 = vadd.f32 %v98, %v105
    %v107 = vld [vmem:[%s39] sm:$0x3]
    %v108 = vld [vmem:[%s41 + $0x2] sm:$0x1]
    %v109 = vlaneseq
    %v110 = vshrl.u32 %v109, 7
    %v111 = vsub.s32 0, %v110
    %v112 = vrot.slane %v108, %v111
    %v113 = vmul.f32 %v107, %v112
    %v114 = vadd.f32 %v106, %v113
    %s115 = scalar_lea.vmem [#allocation2], 4
    %116 = vst.msk [vmem:[%s115] sm:$0x3] %vm49, %v114
    // Predicated region
    $region10: #{_mrr_forward.1} parent=1 // pred_check
      _
    $region11: #{_mrr_forward.1} parent=1 // pred_check_branch
      %118 = sbr.rel (0) target = $region13
    $region12: #{_mrr_forward.1} parent=1 // pred_region
      %s120 = ssub.s32 96, 96
      %121 = vsyncadd [#allocation3], %s120
      %s122 = sshll.u32 [#allocation2], 4
      %s123 = int_to_ptr.vmem [resolvable:$true] %s122
      %128 = dma.vmem_to_hbm [thread:$0]  %s123, 96, %s2, [#allocation3], 32, 32, 2
    $region13: #{_mrr_forward.1} parent=1 // pred_fallthru
      _
    // Predicated region
    $region14: #{_mrr_forward.1} parent=1 // pred_check
      _
    $region15: #{_mrr_forward.1} parent=1 // pred_check_branch
      %130 = sbr.rel (0) target = $region17
    $region16: #{_mrr_forward.1} parent=1 // pred_region
      %131 = dma.done [#allocation3], 96
    $region17: #{_mrr_forward.1} parent=1 // pred_fallthru
      _
    %132 = vsyncpa [#allocation3], 1

</llo_original>
